<compile_context>
chip_gen: v5e
topology: v5e:2x2
jax: 0.10.0
libtpu: 0.0.40
codegen_flags: <defaults>
</compile_context>

<pallas_src>
import jax
import jax.numpy as jnp
from jax.experimental import pallas as pl
from jax.experimental.pallas import tpu as pltpu


def _round_up(n, m):
    return ((n + m - 1) // m) * m


def mlp_kernel(x_ref, w1_ref, b1_ref, w2_ref, b2_ref, w3_ref, b3_ref, out_ref):
    # Transposed compute: batch lives on the lane axis.
    #   x_ref : (6, TB)            w* : (out, in)      b* : (out, 1)
    #   out_ref: (2, TB)
    x = x_ref[...]

    h1 = jnp.dot(w1_ref[...], x, preferred_element_type=jnp.float32) + b1_ref[...]
    h1 = jnp.maximum(h1, 0.0)                                   # (128, TB) f32

    h2 = jnp.dot(w2_ref[...], h1.astype(w2_ref.dtype),
                 preferred_element_type=jnp.float32) + b2_ref[...]
    h2 = jnp.maximum(h2, 0.0)                                   # (128, TB) f32

    logits = jnp.dot(w3_ref[...], h2.astype(w3_ref.dtype),
                     preferred_element_type=jnp.float32) + b3_ref[...]   # (2, TB)

    # Two-class softmax, closed (sigmoid) form:
    #   p0 = 1 / (1 + exp(l1 - l0)),  p1 = 1 - p0
    # Exact same result as stable softmax, no cross-lane reduce, single exp.
    d = logits[1:2, :] - logits[0:1, :]                          # (1, TB)
    p0 = 1.0 / (1.0 + jnp.exp(d))
    out_ref[0:1, :] = p0
    out_ref[1:2, :] = 1.0 - p0


def net_forward(x, params, *, block_b=1024, use_bf16=False):
    """x: (B, 6) float32. Returns (B, 2) float32 softmax probabilities."""
    w1, b1, w2, b2, w3, b3 = params          # w*: (out, in), b*: (out, 1)
    B, d_in = x.shape
    hidden = w1.shape[0]
    n_cls = w3.shape[0]

    # Lane-aligned batch tile; never much larger than the batch itself.
    # (On v7x, keep block_b <= ~B/2 for large B so both TensorCores get grid steps.)
    block_b = max(128, min(_round_up(block_b, 128), _round_up(B, 128)))
    Bp = _round_up(B, block_b)

    # Lane-dense transposed input (6, Bp).  Pad + transpose fuse into one XLA copy,
    # so there is no extra HBM round trip compared with the transpose alone.
    xt = jnp.transpose(jnp.pad(x, ((0, Bp - B), (0, 0))))

    if use_bf16:  # v6e/v7x: bf16 MXU inputs, f32 accumulation (relaxes accuracy to ~1e-2)
        xt = xt.astype(jnp.bfloat16)
        w1, w2, w3 = (w.astype(jnp.bfloat16) for w in (w1, w2, w3))

    grid = (Bp // block_b,)

    flops = 2 * Bp * (d_in * hidden + hidden * hidden + hidden * n_cls)
    bytes_accessed = (
        xt.size * xt.dtype.itemsize
        + Bp * n_cls * 4
        + sum(int(a.size) * a.dtype.itemsize for a in (w1, b1, w2, b2, w3, b3))
    )

    out_t = pl.pallas_call(
        mlp_kernel,
        out_shape=jax.ShapeDtypeStruct((n_cls, Bp), jnp.float32),
        grid_spec=pltpu.PrefetchScalarGridSpec(
            num_scalar_prefetch=0,
            grid=grid,
            in_specs=[
                pl.BlockSpec((d_in, block_b), lambda i: (0, i)),     # x.T tile (lane-dense)
                pl.BlockSpec((hidden, d_in), lambda i: (0, 0)),      # w1 (resident)
                pl.BlockSpec((hidden, 1), lambda i: (0, 0)),         # b1
                pl.BlockSpec((hidden, hidden), lambda i: (0, 0)),    # w2
                pl.BlockSpec((hidden, 1), lambda i: (0, 0)),         # b2
                pl.BlockSpec((n_cls, hidden), lambda i: (0, 0)),     # w3
                pl.BlockSpec((n_cls, 1), lambda i: (0, 0)),          # b3
            ],
            out_specs=pl.BlockSpec((n_cls, block_b), lambda i: (0, i)),
        ),
        compiler_params=pltpu.CompilerParams(
            dimension_semantics=("parallel",),
        ),
        cost_estimate=pl.CostEstimate(
            flops=flops, transcendentals=Bp, bytes_accessed=bytes_accessed),
    )(xt, w1, b1, w2, b2, w3, b3)

    # Back to PyTorch layout (B, 2).
    return jnp.transpose(out_t[:, :B])


def init_params(key):
    """PyTorch nn.Linear-style init U(-1/sqrt(fan_in), 1/sqrt(fan_in)); weights stored (out, in)."""
    def linear(key, fan_in, fan_out):
        kw, kb = jax.random.split(key)
        bound = 1.0 / jnp.sqrt(jnp.float32(fan_in))
        w = jax.random.uniform(kw, (fan_out, fan_in), jnp.float32, -bound, bound)
        b = jax.random.uniform(kb, (fan_out, 1), jnp.float32, -bound, bound)
        return w, b

    k1, k2, k3 = jax.random.split(key, 3)
    w1, b1 = linear(k1, 6, 128)
    w2, b2 = linear(k2, 128, 128)
    w3, b3 = linear(k3, 128, 2)
    return (w1, b1, w2, b2, w3, b3)


if __name__ == "__main__":
    key = jax.random.PRNGKey(0)
    k_params, k_x = jax.random.split(key)

    params = init_params(k_params)
    B = 8
    x = jax.random.normal(k_x, (B, 6), jnp.float32)

    out = net_forward(x, params)
    out = jax.block_until_ready(out)

    # Reference check in plain JAX (same math as the PyTorch module).
    w1, b1, w2, b2, w3, b3 = params
    h = jnp.maximum(x @ w1.T + b1.T, 0.0)
    h = jnp.maximum(h @ w2.T + b2.T, 0.0)
    logits = h @ w3.T + b3.T
    ref = jax.nn.softmax(logits, axis=-1)

    assert out.shape == (B, 2)
    assert jnp.allclose(out, ref, atol=1e-5, rtol=1e-5)
    assert jnp.allclose(jnp.sum(out, axis=-1), 1.0, atol=1e-5)

    print("KERNEL_OK")
</pallas_src>

<mosaic_0001>
module attributes {stable_mosaic.version = 11 : i64} {
  func.func @mlp_kernel(%arg0: i32, %arg1: memref<6x128xf32, #tpu.memory_space<vmem>>, %arg2: memref<128x6xf32, #tpu.memory_space<vmem>>, %arg3: memref<128x1xf32, #tpu.memory_space<vmem>>, %arg4: memref<128x128xf32, #tpu.memory_space<vmem>>, %arg5: memref<128x1xf32, #tpu.memory_space<vmem>>, %arg6: memref<2x128xf32, #tpu.memory_space<vmem>>, %arg7: memref<2x1xf32, #tpu.memory_space<vmem>>, %arg8: memref<2x128xf32, #tpu.memory_space<vmem>>) attributes {dimension_semantics = [#tpu.dimension_semantics<parallel>], iteration_bounds = array<i64: 1>, scalar_prefetch = 0 : i64, scratch_operands = 0 : i64, tpu.core_type = #tpu.core_type<tc>, window_params = [{transform_indices = @transform_0, window_bounds = array<i64: 6, 128>}, {pipeline_mode = #tpu.pipeline_mode<synchronous>, transform_indices = @transform_1, window_bounds = array<i64: 128, 6>}, {pipeline_mode = #tpu.pipeline_mode<synchronous>, transform_indices = @transform_2, window_bounds = array<i64: 128, 1>}, {pipeline_mode = #tpu.pipeline_mode<synchronous>, transform_indices = @transform_3, window_bounds = array<i64: 128, 128>}, {pipeline_mode = #tpu.pipeline_mode<synchronous>, transform_indices = @transform_4, window_bounds = array<i64: 128, 1>}, {pipeline_mode = #tpu.pipeline_mode<synchronous>, transform_indices = @transform_5, window_bounds = array<i64: 2, 128>}, {pipeline_mode = #tpu.pipeline_mode<synchronous>, transform_indices = @transform_6, window_bounds = array<i64: 2, 1>}, {transform_indices = @transform_7, window_bounds = array<i64: 2, 128>}]} {
    %c0 = arith.constant 0 : index
    %c0_0 = arith.constant 0 : index
    %0 = vector.load %arg1[%c0, %c0_0] : memref<6x128xf32, #tpu.memory_space<vmem>>, vector<6x128xf32>
    %c0_1 = arith.constant 0 : index
    %c0_2 = arith.constant 0 : index
    %1 = vector.load %arg2[%c0_1, %c0_2] : memref<128x6xf32, #tpu.memory_space<vmem>>, vector<128x6xf32>
    %cst = arith.constant dense<0.000000e+00> : vector<128x128xf32>
    %2 = tpu.matmul %1, %0, %cst {dimension_numbers = #tpu.dot_dimension_numbers<[1], [0], [0], [1], [0, 0, 1, 1], [], []>} : vector<128x6xf32>, vector<6x128xf32>, vector<128x128xf32> -> vector<128x128xf32>
    %c0_3 = arith.constant 0 : index
    %c0_4 = arith.constant 0 : index
    %3 = vector.load %arg3[%c0_3, %c0_4] : memref<128x1xf32, #tpu.memory_space<vmem>>, vector<128x1xf32>
    %4 = vector.broadcast %3 : vector<128x1xf32> to vector<128x128xf32>
    %5 = arith.addf %2, %4 : vector<128x128xf32>
    %cst_5 = arith.constant 0.000000e+00 : f32
    %6 = vector.broadcast %cst_5 : f32 to vector<128x128xf32>
    %7 = arith.maximumf %5, %6 : vector<128x128xf32>
    %c0_6 = arith.constant 0 : index
    %c0_7 = arith.constant 0 : index
    %8 = vector.load %arg4[%c0_6, %c0_7] : memref<128x128xf32, #tpu.memory_space<vmem>>, vector<128x128xf32>
    %cst_8 = arith.constant dense<0.000000e+00> : vector<128x128xf32>
    %9 = tpu.matmul %8, %7, %cst_8 {dimension_numbers = #tpu.dot_dimension_numbers<[1], [0], [0], [1], [0, 0, 1, 1], [], []>} : vector<128x128xf32>, vector<128x128xf32>, vector<128x128xf32> -> vector<128x128xf32>
    %c0_9 = arith.constant 0 : index
    %c0_10 = arith.constant 0 : index
    %10 = vector.load %arg5[%c0_9, %c0_10] : memref<128x1xf32, #tpu.memory_space<vmem>>, vector<128x1xf32>
    %11 = vector.broadcast %10 : vector<128x1xf32> to vector<128x128xf32>
    %12 = arith.addf %9, %11 : vector<128x128xf32>
    %cst_11 = arith.constant 0.000000e+00 : f32
    %13 = vector.broadcast %cst_11 : f32 to vector<128x128xf32>
    %14 = arith.maximumf %12, %13 : vector<128x128xf32>
    %c0_12 = arith.constant 0 : index
    %c0_13 = arith.constant 0 : index
    %15 = vector.load %arg6[%c0_12, %c0_13] : memref<2x128xf32, #tpu.memory_space<vmem>>, vector<2x128xf32>
    %cst_14 = arith.constant dense<0.000000e+00> : vector<2x128xf32>
    %16 = tpu.matmul %15, %14, %cst_14 {dimension_numbers = #tpu.dot_dimension_numbers<[1], [0], [0], [1], [0, 0, 1, 1], [], []>} : vector<2x128xf32>, vector<128x128xf32>, vector<2x128xf32> -> vector<2x128xf32>
    %c0_15 = arith.constant 0 : index
    %c0_16 = arith.constant 0 : index
    %17 = vector.load %arg7[%c0_15, %c0_16] : memref<2x1xf32, #tpu.memory_space<vmem>>, vector<2x1xf32>
    %18 = vector.broadcast %17 : vector<2x1xf32> to vector<2x128xf32>
    %19 = arith.addf %16, %18 : vector<2x128xf32>
    %20 = vector.extract_strided_slice %19 {offsets = [1, 0], sizes = [1, 128], strides = [1, 1]} : vector<2x128xf32> to vector<1x128xf32>
    %21 = vector.extract_strided_slice %19 {offsets = [0, 0], sizes = [1, 128], strides = [1, 1]} : vector<2x128xf32> to vector<1x128xf32>
    %22 = arith.subf %20, %21 : vector<1x128xf32>
    %23 = math.exp %22 : vector<1x128xf32>
    %cst_17 = arith.constant 1.000000e+00 : f32
    %24 = vector.broadcast %cst_17 : f32 to vector<1x128xf32>
    %25 = arith.addf %24, %23 : vector<1x128xf32>
    %cst_18 = arith.constant 1.000000e+00 : f32
    %26 = vector.broadcast %cst_18 : f32 to vector<1x128xf32>
    %27 = arith.divf %26, %25 : vector<1x128xf32>
    %c0_19 = arith.constant 0 : index
    %c0_20 = arith.constant 0 : index
    %28 = vector.load %arg8[%c0_19, %c0_20] : memref<2x128xf32, #tpu.memory_space<vmem>>, vector<1x128xf32>
    tpu.vector_store %arg8[%c0_19, %c0_20], %27 {strides = array<i32>} : memref<2x128xf32, #tpu.memory_space<vmem>>, vector<1x128xf32>,
    %cst_21 = arith.constant 1.000000e+00 : f32
    %29 = vector.broadcast %cst_21 : f32 to vector<1x128xf32>
    %30 = arith.subf %29, %27 : vector<1x128xf32>
    %c1 = arith.constant 1 : index
    %c0_22 = arith.constant 0 : index
    %31 = vector.load %arg8[%c1, %c0_22] : memref<2x128xf32, #tpu.memory_space<vmem>>, vector<1x128xf32>
    tpu.vector_store %arg8[%c1, %c0_22], %30 {strides = array<i32>} : memref<2x128xf32, #tpu.memory_space<vmem>>, vector<1x128xf32>,
    return
  }
  func.func @transform_0(%arg0: i32) -> (i32, i32) {
    %c0_i32 = arith.constant 0 : i32
    %c0_i32_0 = arith.constant 0 : i32
    return %c0_i32, %arg0 : i32, i32
  }
  func.func @transform_1(%arg0: i32) -> (i32, i32) {
    %c0_i32 = arith.constant 0 : i32
    %c0_i32_0 = arith.constant 0 : i32
    %c0_i32_1 = arith.constant 0 : i32
    return %c0_i32, %c0_i32_0 : i32, i32
  }
  func.func @transform_2(%arg0: i32) -> (i32, i32) {
    %c0_i32 = arith.constant 0 : i32
    %c0_i32_0 = arith.constant 0 : i32
    %c0_i32_1 = arith.constant 0 : i32
    return %c0_i32, %c0_i32_0 : i32, i32
  }
  func.func @transform_3(%arg0: i32) -> (i32, i32) {
    %c0_i32 = arith.constant 0 : i32
    %c0_i32_0 = arith.constant 0 : i32
    %c0_i32_1 = arith.constant 0 : i32
    return %c0_i32, %c0_i32_0 : i32, i32
  }
  func.func @transform_4(%arg0: i32) -> (i32, i32) {
    %c0_i32 = arith.constant 0 : i32
    %c0_i32_0 = arith.constant 0 : i32
    %c0_i32_1 = arith.constant 0 : i32
    return %c0_i32, %c0_i32_0 : i32, i32
  }
  func.func @transform_5(%arg0: i32) -> (i32, i32) {
    %c0_i32 = arith.constant 0 : i32
    %c0_i32_0 = arith.constant 0 : i32
    %c0_i32_1 = arith.constant 0 : i32
    return %c0_i32, %c0_i32_0 : i32, i32
  }
  func.func @transform_6(%arg0: i32) -> (i32, i32) {
    %c0_i32 = arith.constant 0 : i32
    %c0_i32_0 = arith.constant 0 : i32
    %c0_i32_1 = arith.constant 0 : i32
    return %c0_i32, %c0_i32_0 : i32, i32
  }
  func.func @transform_7(%arg0: i32) -> (i32, i32) {
    %c0_i32 = arith.constant 0 : i32
    %c0_i32_0 = arith.constant 0 : i32
    return %c0_i32, %arg0 : i32, i32
  }
}

</mosaic_0001>

<llo_original>
// kernel: tpu_custom_call.1
$region0: #{tpu_custom_call.1}
  #allocation0 [shape = 'u32[]', space=smem, size = 0x4, offset = 0x4, fixed_abs, tag = 'smem constant byte address 0x4 - core index']
  #allocation1 [shape = 'u32[72,128]{1,0:T(1,128)}', space=vmem, size = 0x9000, scoped, tag = 'internal scratch']
  %s0 = inlined_call_operand.vmem [shape: f32[6,128], index: 0, kind: input, shape index: {}]
  %s1 = inlined_call_operand.vmem [shape: f32[128,6], index: 1, kind: input, shape index: {}]
  %s2 = inlined_call_operand.vmem [shape: f32[128,1], index: 2, kind: input, shape index: {}]
  %s3 = inlined_call_operand.vmem [shape: f32[128,128], index: 3, kind: input, shape index: {}]
  %s4 = inlined_call_operand.vmem [shape: f32[128,1], index: 4, kind: input, shape index: {}]
  %s5 = inlined_call_operand.vmem [shape: f32[2,128], index: 5, kind: input, shape index: {}]
  %s6 = inlined_call_operand.vmem [shape: f32[2,1], index: 6, kind: input, shape index: {}]
  %s7 = inlined_call_operand.hbm [shape: f32[2,128], index: 7, kind: output, shape index: {}]
  %s8 = sld [smem:[#allocation0]]
  $region38: #{tpu_custom_call.1} parent=0
    _
  %s10 = ssub.s32 1, %s8
  %s11 = scalar_select 0, %s10, %s8
  $region1: #{tpu_custom_call.1} parent=0
    #allocation2 [shape = 'u8[1024]{0}', space=vmem, size = 0x400, scoped, tag = 'output window, operand 0, single buffered']
    #allocation3 [shape = 's32[1]{0}', space=sflag, size = 0x4, scoped, tag = 'scoped memory for tpu_custom_call.1']
    %12 = vsyncpa [#allocation3], 0
    // Predicated region
    $region2: #{tpu_custom_call.1} parent=1 // pred_check
      _
    $region3: #{tpu_custom_call.1} parent=1 // pred_check_branch
      %14 = sbr.rel (0) target = $region5
    $region4: #{tpu_custom_call.1} parent=1 // pred_region
      _
    $region5: #{tpu_custom_call.1} parent=1 // pred_fallthru
      _
    // Predicated region
    $region6: #{tpu_custom_call.1} parent=1 // pred_check
      _
    $region7: #{tpu_custom_call.1} parent=1 // pred_check_branch
      %16 = sbr.rel (0) target = $region9
    $region8: #{tpu_custom_call.1} parent=1 // pred_region
      _
    $region9: #{tpu_custom_call.1} parent=1 // pred_fallthru
      _
    // Predicated region
    $region10: #{tpu_custom_call.1} parent=1 // pred_check
      _
    $region11: #{tpu_custom_call.1} parent=1 // pred_check_branch
      %18 = sbr.rel (0) target = $region13
    $region12: #{tpu_custom_call.1} parent=1 // pred_region
      _
    $region13: #{tpu_custom_call.1} parent=1 // pred_fallthru
      _
    // Predicated region
    $region14: #{tpu_custom_call.1} parent=1 // pred_check
      _
    $region15: #{tpu_custom_call.1} parent=1 // pred_check_branch
      %20 = sbr.rel (0) target = $region17
    $region16: #{tpu_custom_call.1} parent=1 // pred_region
      _
    $region17: #{tpu_custom_call.1} parent=1 // pred_fallthru
      _
    // Predicated region
    $region18: #{tpu_custom_call.1} parent=1 // pred_check
      _
    $region19: #{tpu_custom_call.1} parent=1 // pred_check_branch
      %22 = sbr.rel (0) target = $region21
    $region20: #{tpu_custom_call.1} parent=1 // pred_region
      _
    $region21: #{tpu_custom_call.1} parent=1 // pred_fallthru
      _
    // Predicated region
    $region22: #{tpu_custom_call.1} parent=1 // pred_check
      _
    $region23: #{tpu_custom_call.1} parent=1 // pred_check_branch
      %24 = sbr.rel (0) target = $region25
    $region24: #{tpu_custom_call.1} parent=1 // pred_region
      _
    $region25: #{tpu_custom_call.1} parent=1 // pred_fallthru
      _
    // Predicated region
    $region26: #{tpu_custom_call.1} parent=1 // pred_check
      _
    $region27: #{tpu_custom_call.1} parent=1 // pred_check_branch
      %26 = sbr.rel (0) target = $region29
    $region28: #{tpu_custom_call.1} parent=1 // pred_region
      _
    $region29: #{tpu_custom_call.1} parent=1 // pred_fallthru
      _
    %v27 = vld [vmem:[%s0] sm:$0x3f]
    %v28 = vld [vmem:[%s1] sm:$0xff]
    %v29 = vld [vmem:[%s1 + $0x8] sm:$0xff]
    %v30 = vld [vmem:[%s1 + $0x10] sm:$0xff]
    %v31 = vld [vmem:[%s1 + $0x18] sm:$0xff]
    %v32 = vld [vmem:[%s1 + $0x20] sm:$0xff]
    %v33 = vld [vmem:[%s1 + $0x28] sm:$0xff]
    %v34 = vld [vmem:[%s1 + $0x30] sm:$0xff]
    %v35 = vld [vmem:[%s1 + $0x38] sm:$0xff]
    %v36 = vld [vmem:[%s1 + $0x40] sm:$0xff]
    %v37 = vld [vmem:[%s1 + $0x48] sm:$0xff]
    %v38 = vld [vmem:[%s1 + $0x50] sm:$0xff]
    %v39 = vld [vmem:[%s1 + $0x58] sm:$0xff]
    %v40 = vld [vmem:[%s1 + $0x60] sm:$0xff]
    %v41 = vld [vmem:[%s1 + $0x68] sm:$0xff]
    %v42 = vld [vmem:[%s1 + $0x70] sm:$0xff]
    %v43 = vld [vmem:[%s1 + $0x78] sm:$0xff]
    %v44 = vld [vmem:[%s2] sm:$0xff]
    %v45 = vld [vmem:[%s2 + $0x8] sm:$0xff]
    %v46 = vld [vmem:[%s2 + $0x10] sm:$0xff]
    %v47 = vld [vmem:[%s2 + $0x18] sm:$0xff]
    %v48 = vld [vmem:[%s2 + $0x20] sm:$0xff]
    %v49 = vld [vmem:[%s2 + $0x28] sm:$0xff]
    %v50 = vld [vmem:[%s2 + $0x30] sm:$0xff]
    %v51 = vld [vmem:[%s2 + $0x38] sm:$0xff]
    %v52 = vld [vmem:[%s2 + $0x40] sm:$0xff]
    %v53 = vld [vmem:[%s2 + $0x48] sm:$0xff]
    %v54 = vld [vmem:[%s2 + $0x50] sm:$0xff]
    %v55 = vld [vmem:[%s2 + $0x58] sm:$0xff]
    %v56 = vld [vmem:[%s2 + $0x60] sm:$0xff]
    %v57 = vld [vmem:[%s2 + $0x68] sm:$0xff]
    %v58 = vld [vmem:[%s2 + $0x70] sm:$0xff]
    %v59 = vld [vmem:[%s2 + $0x78] sm:$0xff]
    %61 = vset.pattern.permute.xlu0 0
    %62 = vperm.xlu0 %61, %v44
    %v63 = vpop.permute.xlu0 %62
    %66 = vset.pattern.permute.xlu0 0
    %67 = vperm.xlu0 %66, %v45
    %v68 = vpop.permute.xlu0 %67
    %71 = vset.pattern.permute.xlu0 0
    %72 = vperm.xlu0 %71, %v46
    %v73 = vpop.permute.xlu0 %72
    %76 = vset.pattern.permute.xlu0 0
    %77 = vperm.xlu0 %76, %v47
    %v78 = vpop.permute.xlu0 %77
    %81 = vset.pattern.permute.xlu0 0
    %82 = vperm.xlu0 %81, %v48
    %v83 = vpop.permute.xlu0 %82
    %86 = vset.pattern.permute.xlu0 0
    %87 = vperm.xlu0 %86, %v49
    %v88 = vpop.permute.xlu0 %87
    %91 = vset.pattern.permute.xlu0 0
    %92 = vperm.xlu0 %91, %v50
    %v93 = vpop.permute.xlu0 %92
    %96 = vset.pattern.permute.xlu0 0
    %97 = vperm.xlu0 %96, %v51
    %v98 = vpop.permute.xlu0 %97
    %101 = vset.pattern.permute.xlu0 0
    %102 = vperm.xlu0 %101, %v52
    %v103 = vpop.permute.xlu0 %102
    %106 = vset.pattern.permute.xlu0 0
    %107 = vperm.xlu0 %106, %v53
    %v108 = vpop.permute.xlu0 %107
    %111 = vset.pattern.permute.xlu0 0
    %112 = vperm.xlu0 %111, %v54
    %v113 = vpop.permute.xlu0 %112
    %116 = vset.pattern.permute.xlu0 0
    %117 = vperm.xlu0 %116, %v55
    %v118 = vpop.permute.xlu0 %117
    %121 = vset.pattern.permute.xlu0 0
    %122 = vperm.xlu0 %121, %v56
    %v123 = vpop.permute.xlu0 %122
    %126 = vset.pattern.permute.xlu0 0
    %127 = vperm.xlu0 %126, %v57
    %v128 = vpop.permute.xlu0 %127
    %131 = vset.pattern.permute.xlu0 0
    %132 = vperm.xlu0 %131, %v58
    %v133 = vpop.permute.xlu0 %132
    %136 = vset.pattern.permute.xlu0 0
    %137 = vperm.xlu0 %136, %v59
    %v138 = vpop.permute.xlu0 %137
    %vm140 = vcmask 48128
    %v142 = vsel %vm140, %v28, 0
    %v145 = vsel %vm140, %v29, 0
    %v148 = vsel %vm140, %v30, 0
    %v151 = vsel %vm140, %v31, 0
    %v154 = vsel %vm140, %v32, 0
    %v157 = vsel %vm140, %v33, 0
    %v160 = vsel %vm140, %v34, 0
    %v163 = vsel %vm140, %v35, 0
    %v166 = vsel %vm140, %v36, 0
    %v169 = vsel %vm140, %v37, 0
    %v172 = vsel %vm140, %v38, 0
    %v175 = vsel %vm140, %v39, 0
    %v178 = vsel %vm140, %v40, 0
    %v181 = vsel %vm140, %v41, 0
    %v184 = vsel %vm140, %v42, 0
    %v187 = vsel %vm140, %v43, 0
    %vm189 = vcmask 1045504
    %v191 = vsel %vm189, %v27, 0
    %193 = vmatpush.msra.mxu0 0.0
    %194 = vmatpush.msra.mxu0 0.0
    %195 = vmatpush.msra.mxu0 0.0
    %196 = vmatpush.msra.mxu0 0.0
    %197 = vmatpush.msra.mxu0 0.0
    %198 = vmatpush.msra.mxu0 0.0
    %199 = vmatpush.msra.mxu0 0.0
    %200 = vmatpush.msra.mxu0 0.0
    %201 = vmatpush.msra.mxu0 0.0
    %202 = vmatpush.msra.mxu0 0.0
    %203 = vmatpush.msra.mxu0 0.0
    %204 = vmatpush.msra.mxu0 0.0
    %205 = vmatpush.msra.mxu0 0.0
    %206 = vmatpush.msra.mxu0 0.0
    %207 = vmatpush.msra.mxu0 0.0
    %208 = vmatpush.msra.mxu0 %v191
    %209 = vmatmul.f32.gmra.mxu0 %v142
    %v210 = vpop.f32.mrf.mxu0
    %v211 = vadd.f32 %v63, %v210
    %212 = vmatmul.f32.gmra.mxu0 %v145
    %v213 = vpop.f32.mrf.mxu0
    %v214 = vadd.f32 %v68, %v213
    %215 = vmatmul.f32.gmra.mxu0 %v148
    %v216 = vpop.f32.mrf.mxu0
    %v217 = vadd.f32 %v73, %v216
    %218 = vmatmul.f32.gmra.mxu0 %v151
    %v219 = vpop.f32.mrf.mxu0
    %v220 = vadd.f32 %v78, %v219
    %221 = vmatmul.f32.gmra.mxu0 %v154
    %v222 = vpop.f32.mrf.mxu0
    %v223 = vadd.f32 %v83, %v222
    %224 = vmatmul.f32.gmra.mxu0 %v157
    %v225 = vpop.f32.mrf.mxu0
    %v226 = vadd.f32 %v88, %v225
    %227 = vmatmul.f32.gmra.mxu0 %v160
    %v228 = vpop.f32.mrf.mxu0
    %v229 = vadd.f32 %v93, %v228
    %230 = vmatmul.f32.gmra.mxu0 %v163
    %v231 = vpop.f32.mrf.mxu0
    %v232 = vadd.f32 %v98, %v231
    %233 = vmatmul.f32.gmra.mxu0 %v166
    %v234 = vpop.f32.mrf.mxu0
    %v235 = vadd.f32 %v103, %v234
    %236 = vmatmul.f32.gmra.mxu0 %v169
    %v237 = vpop.f32.mrf.mxu0
    %v238 = vadd.f32 %v108, %v237
    %239 = vmatmul.f32.gmra.mxu0 %v172
    %v240 = vpop.f32.mrf.mxu0
    %v241 = vadd.f32 %v113, %v240
    %242 = vmatmul.f32.gmra.mxu0 %v175
    %v243 = vpop.f32.mrf.mxu0
    %v244 = vadd.f32 %v118, %v243
    %245 = vmatmul.f32.gmra.mxu0 %v178
    %v246 = vpop.f32.mrf.mxu0
    %v247 = vadd.f32 %v123, %v246
    %248 = vmatmul.f32.gmra.mxu0 %v181
    %v249 = vpop.f32.mrf.mxu0
    %v250 = vadd.f32 %v128, %v249
    %251 = vmatmul.f32.gmra.mxu0 %v184
    %v252 = vpop.f32.mrf.mxu0
    %v253 = vadd.f32 %v133, %v252
    %254 = vmatmul.f32.gmra.mxu0 %v187
    %v255 = vpop.f32.mrf.mxu0
    %v256 = vadd.f32 %v138, %v255
    %257 = vdwg.mxu0
    %v258 = vmax.f32 %v211, 0.0
    %v259 = vmax.f32 %v214, 0.0
    %v260 = vmax.f32 %v217, 0.0
    %v261 = vmax.f32 %v220, 0.0
    %v262 = vmax.f32 %v223, 0.0
    %v263 = vmax.f32 %v226, 0.0
    %v264 = vmax.f32 %v229, 0.0
    %v265 = vmax.f32 %v232, 0.0
    %v266 = vmax.f32 %v235, 0.0
    %v267 = vmax.f32 %v238, 0.0
    %v268 = vmax.f32 %v241, 0.0
    %v269 = vmax.f32 %v244, 0.0
    %v270 = vmax.f32 %v247, 0.0
    %v271 = vmax.f32 %v250, 0.0
    %v272 = vmax.f32 %v253, 0.0
    %v273 = vmax.f32 %v256, 0.0
    %v274 = vld [vmem:[%s3] sm:$0xff]
    %v275 = vld [vmem:[%s3 + $0x8] sm:$0xff]
    %v276 = vld [vmem:[%s3 + $0x10] sm:$0xff]
    %v277 = vld [vmem:[%s3 + $0x18] sm:$0xff]
    %v278 = vld [vmem:[%s3 + $0x20] sm:$0xff]
    %v279 = vld [vmem:[%s3 + $0x28] sm:$0xff]
    %v280 = vld [vmem:[%s3 + $0x30] sm:$0xff]
    %v281 = vld [vmem:[%s3 + $0x38] sm:$0xff]
    %v282 = vld [vmem:[%s3 + $0x40] sm:$0xff]
    %v283 = vld [vmem:[%s3 + $0x48] sm:$0xff]
    %v284 = vld [vmem:[%s3 + $0x50] sm:$0xff]
    %v285 = vld [vmem:[%s3 + $0x58] sm:$0xff]
    %v286 = vld [vmem:[%s3 + $0x60] sm:$0xff]
    %v287 = vld [vmem:[%s3 + $0x68] sm:$0xff]
    %v288 = vld [vmem:[%s3 + $0x70] sm:$0xff]
    %v289 = vld [vmem:[%s3 + $0x78] sm:$0xff]
    %v290 = vld [vmem:[%s4] sm:$0xff]
    %v291 = vld [vmem:[%s4 + $0x8] sm:$0xff]
    %v292 = vld [vmem:[%s4 + $0x10] sm:$0xff]
    %v293 = vld [vmem:[%s4 + $0x18] sm:$0xff]
    %v294 = vld [vmem:[%s4 + $0x20] sm:$0xff]
    %v295 = vld [vmem:[%s4 + $0x28] sm:$0xff]
    %v296 = vld [vmem:[%s4 + $0x30] sm:$0xff]
    %v297 = vld [vmem:[%s4 + $0x38] sm:$0xff]
    %v298 = vld [vmem:[%s4 + $0x40] sm:$0xff]
    %v299 = vld [vmem:[%s4 + $0x48] sm:$0xff]
    %v300 = vld [vmem:[%s4 + $0x50] sm:$0xff]
    %v301 = vld [vmem:[%s4 + $0x58] sm:$0xff]
    %v302 = vld [vmem:[%s4 + $0x60] sm:$0xff]
    %v303 = vld [vmem:[%s4 + $0x68] sm:$0xff]
    %v304 = vld [vmem:[%s4 + $0x70] sm:$0xff]
    %v305 = vld [vmem:[%s4 + $0x78] sm:$0xff]
    %307 = vset.pattern.permute.xlu0 0
    %308 = vperm.xlu0 %307, %v290
    %v309 = vpop.permute.xlu0 %308
    %312 = vset.pattern.permute.xlu0 0
    %313 = vperm.xlu0 %312, %v291
    %v314 = vpop.permute.xlu0 %313
    %317 = vset.pattern.permute.xlu0 0
    %318 = vperm.xlu0 %317, %v292
    %v319 = vpop.permute.xlu0 %318
    %322 = vset.pattern.permute.xlu0 0
    %323 = vperm.xlu0 %322, %v293
    %v324 = vpop.permute.xlu0 %323
    %327 = vset.pattern.permute.xlu0 0
    %328 = vperm.xlu0 %327, %v294
    %v329 = vpop.permute.xlu0 %328
    %332 = vset.pattern.permute.xlu0 0
    %333 = vperm.xlu0 %332, %v295
    %v334 = vpop.permute.xlu0 %333
    %337 = vset.pattern.permute.xlu0 0
    %338 = vperm.xlu0 %337, %v296
    %v339 = vpop.permute.xlu0 %338
    %342 = vset.pattern.permute.xlu0 0
    %343 = vperm.xlu0 %342, %v297
    %v344 = vpop.permute.xlu0 %343
    %347 = vset.pattern.permute.xlu0 0
    %348 = vperm.xlu0 %347, %v298
    %v349 = vpop.permute.xlu0 %348
    %352 = vset.pattern.permute.xlu0 0
    %353 = vperm.xlu0 %352, %v299
    %v354 = vpop.permute.xlu0 %353
    %357 = vset.pattern.permute.xlu0 0
    %358 = vperm.xlu0 %357, %v300
    %v359 = vpop.permute.xlu0 %358
    %362 = vset.pattern.permute.xlu0 0
    %363 = vperm.xlu0 %362, %v301
    %v364 = vpop.permute.xlu0 %363
    %367 = vset.pattern.permute.xlu0 0
    %368 = vperm.xlu0 %367, %v302
    %v369 = vpop.permute.xlu0 %368
    %372 = vset.pattern.permute.xlu0 0
    %373 = vperm.xlu0 %372, %v303
    %v374 = vpop.permute.xlu0 %373
    %377 = vset.pattern.permute.xlu0 0
    %378 = vperm.xlu0 %377, %v304
    %v379 = vpop.permute.xlu0 %378
    %382 = vset.pattern.permute.xlu0 0
    %383 = vperm.xlu0 %382, %v305
    %v384 = vpop.permute.xlu0 %383
    %386 = vmatpush.msra.mxu0 %v273
    %387 = vmatpush.msra.mxu0 %v272
    %388 = vmatpush.msra.mxu0 %v271
    %389 = vmatpush.msra.mxu0 %v270
    %390 = vmatpush.msra.mxu0 %v269
    %391 = vmatpush.msra.mxu0 %v268
    %392 = vmatpush.msra.mxu0 %v267
    %393 = vmatpush.msra.mxu0 %v266
    %394 = vmatpush.msra.mxu0 %v265
    %395 = vmatpush.msra.mxu0 %v264
    %396 = vmatpush.msra.mxu0 %v263
    %397 = vmatpush.msra.mxu0 %v262
    %398 = vmatpush.msra.mxu0 %v261
    %399 = vmatpush.msra.mxu0 %v260
    %400 = vmatpush.msra.mxu0 %v259
    %401 = vmatpush.msra.mxu0 %v258
    %402 = vmatmul.f32.gmra.mxu0 %v274
    %v403 = vpop.f32.mrf.mxu0
    %v404 = vadd.f32 %v309, %v403
    %405 = vmatmul.f32.gmra.mxu0 %v275
    %v406 = vpop.f32.mrf.mxu0
    %v407 = vadd.f32 %v314, %v406
    %408 = vmatmul.f32.gmra.mxu0 %v276
    %v409 = vpop.f32.mrf.mxu0
    %v410 = vadd.f32 %v319, %v409
    %411 = vmatmul.f32.gmra.mxu0 %v277
    %v412 = vpop.f32.mrf.mxu0
    %v413 = vadd.f32 %v324, %v412
    %414 = vmatmul.f32.gmra.mxu0 %v278
    %v415 = vpop.f32.mrf.mxu0
    %v416 = vadd.f32 %v329, %v415
    %417 = vmatmul.f32.gmra.mxu0 %v279
    %v418 = vpop.f32.mrf.mxu0
    %v419 = vadd.f32 %v334, %v418
    %420 = vmatmul.f32.gmra.mxu0 %v280
    %v421 = vpop.f32.mrf.mxu0
    %v422 = vadd.f32 %v339, %v421
    %423 = vmatmul.f32.gmra.mxu0 %v281
    %v424 = vpop.f32.mrf.mxu0
    %v425 = vadd.f32 %v344, %v424
    %426 = vmatmul.f32.gmra.mxu0 %v282
    %v427 = vpop.f32.mrf.mxu0
    %v428 = vadd.f32 %v349, %v427
    %429 = vmatmul.f32.gmra.mxu0 %v283
    %v430 = vpop.f32.mrf.mxu0
    %v431 = vadd.f32 %v354, %v430
    %432 = vmatmul.f32.gmra.mxu0 %v284
    %v433 = vpop.f32.mrf.mxu0
    %v434 = vadd.f32 %v359, %v433
    %435 = vmatmul.f32.gmra.mxu0 %v285
    %v436 = vpop.f32.mrf.mxu0
    %v437 = vadd.f32 %v364, %v436
    %438 = vmatmul.f32.gmra.mxu0 %v286
    %v439 = vpop.f32.mrf.mxu0
    %v440 = vadd.f32 %v369, %v439
    %441 = vmatmul.f32.gmra.mxu0 %v287
    %v442 = vpop.f32.mrf.mxu0
    %v443 = vadd.f32 %v374, %v442
    %444 = vmatmul.f32.gmra.mxu0 %v288
    %v445 = vpop.f32.mrf.mxu0
    %v446 = vadd.f32 %v379, %v445
    %447 = vmatmul.f32.gmra.mxu0 %v289
    %v448 = vpop.f32.mrf.mxu0
    %v449 = vadd.f32 %v384, %v448
    %450 = vdwg.mxu0
    %v451 = vmax.f32 %v404, 0.0
    %v452 = vmax.f32 %v407, 0.0
    %v453 = vmax.f32 %v410, 0.0
    %v454 = vmax.f32 %v413, 0.0
    %v455 = vmax.f32 %v416, 0.0
    %v456 = vmax.f32 %v419, 0.0
    %v457 = vmax.f32 %v422, 0.0
    %v458 = vmax.f32 %v425, 0.0
    %v459 = vmax.f32 %v428, 0.0
    %v460 = vmax.f32 %v431, 0.0
    %v461 = vmax.f32 %v434, 0.0
    %v462 = vmax.f32 %v437, 0.0
    %v463 = vmax.f32 %v440, 0.0
    %v464 = vmax.f32 %v443, 0.0
    %v465 = vmax.f32 %v446, 0.0
    %v466 = vmax.f32 %v449, 0.0
    %v467 = vld [vmem:[%s5] sm:$0x3]
    %v468 = vld [vmem:[%s6] sm:$0x3]
    %470 = vset.pattern.permute.xlu0 0
    %471 = vperm.xlu0 %470, %v468
    %v472 = vpop.permute.xlu0 %471
    %474 = vmatpush.msra.mxu0 %v466
    %475 = vmatpush.msra.mxu0 %v465
    %476 = vmatpush.msra.mxu0 %v464
    %477 = vmatpush.msra.mxu0 %v463
    %478 = vmatpush.msra.mxu0 %v462
    %479 = vmatpush.msra.mxu0 %v461
    %480 = vmatpush.msra.mxu0 %v460
    %481 = vmatpush.msra.mxu0 %v459
    %482 = vmatpush.msra.mxu0 %v458
    %483 = vmatpush.msra.mxu0 %v457
    %484 = vmatpush.msra.mxu0 %v456
    %485 = vmatpush.msra.mxu0 %v455
    %486 = vmatpush.msra.mxu0 %v454
    %487 = vmatpush.msra.mxu0 %v453
    %488 = vmatpush.msra.mxu0 %v452
    %489 = vmatpush.msra.mxu0 %v451
    %490 = vmatmul.f32.gmra.mxu0 %v467
    %v491 = vpop.f32.mrf.mxu0
    %v492 = vadd.f32 %v472, %v491
    %493 = vdwg.mxu0
    %v495 = vrot.slane %v492, 7
    %v497 = vsub.f32 %v492, %v495
    %v498 = vmul.f32 %v497, 1.442695
    %v499 = vpow.pop %v498
    %v500 = vadd.f32 %v499, 1.0
    %v501 = vrcp.pop %v500
    %v502 = vmul.f32 %v500, %v501
    %v503 = vsub.f32 1.0, %v502
    %v504 = vmul.f32 %v501, %v503
    %v505 = vadd.f32 %v501, %v504
    %vm506 = vweird.f32 %v500
    %vm507 = vweird.f32 %v501
    %vm508 = vmor %vm506, %vm507
    %v509 = vsel %vm508, %v501, %v505
    %v510 = vand.u32 2147483647, %v500
    %vm511 = vcmp.eq.f32.partialorder %v510, 8.507059e+37
    %v512 = vand.u32 %v500, 2147483648
    %v513 = vor.u32 1.1754944e-38, %v512
    %v514 = vsel %vm511, %v513, %v509
    %v515 = vmul.f32 1.0, %v514
    %516 = vst [vmem:[#allocation2 - $0x1] sm:$0x2] %v515
    %v517 = vsub.f32 1.0, %v515
    %518 = vst [vmem:[#allocation2] sm:$0x2] %v517
    // Predicated region
    $region30: #{tpu_custom_call.1} parent=1 // pred_check
      _
    $region31: #{tpu_custom_call.1} parent=1 // pred_check_branch
      %520 = sbr.rel (0) target = $region33
    $region32: #{tpu_custom_call.1} parent=1 // pred_region
      %522 = vsyncadd [#allocation3], 0
      %s524 = sshll.u32 [#allocation2], 4
      %s525 = int_to_ptr.vmem [resolvable:$true] %s524
      %s526 = sshll.u32 %s7, 4
      %s527 = int_to_ptr.hbm [resolvable:$true] %s526
      %529 = dma.vmem_to_hbm [thread:$0]  %s525, 32, %s527, [#allocation3]
    $region33: #{tpu_custom_call.1} parent=1 // pred_fallthru
      _
    // Predicated region
    $region34: #{tpu_custom_call.1} parent=1 // pred_check
      _
    $region35: #{tpu_custom_call.1} parent=1 // pred_check_branch
      %531 = sbr.rel (0) target = $region37
    $region36: #{tpu_custom_call.1} parent=1 // pred_region
      %533 = dma.done [#allocation3], 32
    $region37: #{tpu_custom_call.1} parent=1 // pred_fallthru
      _
    %534 = vsyncpa [#allocation3], 1

</llo_original>
